<compile_context>
chip_gen: v7x
topology: tpu7x:2x2x1
jax: 0.10.0
libtpu: 0.0.40
codegen_flags: <defaults>
</compile_context>

<pallas_src>
import functools

import jax
import jax.numpy as jnp
from jax.experimental import pallas as pl
from jax.experimental.pallas import tpu as pltpu

_MASK_SENTINEL = -3.4028235e38   # ~ float32 min; marks non-hard / padded pixels


# ----------------------------------------------------------------------------
# Kernel 1: fused uncertainty map + hard-pixel masking
#   pred : (B, C, T)   mask : (B, T)   ->   scores : (B, T)
# ----------------------------------------------------------------------------
def _score_kernel(pred_ref, mask_ref, score_ref):
    p = pred_ref[...]                                       # (B, C, T), T on lanes
    u = jnp.sum(p * jnp.log(p + 1e-6), axis=1)              # (B, T)
    hard = (1.0 - mask_ref[...]) != 0.0                     # matches (1-mask).nonzero()
    score_ref[...] = jnp.where(hard, u, _MASK_SENTINEL)     # lane-dense store


def _plan_hw_tiling(batch, chans, hw, vmem_budget_bytes=12 * 1024 * 1024,
                    max_tile=16384):
    """Pick a lane tile T (mult of 128) and padded HW so grid = HW_pad / T.

    Budget: double-buffered pred(B,C,T) + mask(B,T) + scores(B,T) f32 blocks fit in
    ~12 MiB (safe under the 32 MiB scoped-VMEM default on all generations, incl.
    v7x's 64 MiB physical).  Always >= 2 grid steps when HW allows, so the
    "parallel" axis can split across TensorCores.
    """
    hw128 = -(-hw // 128) * 128
    per_col_bytes = 2 * batch * (chans + 2) * 4
    t_cap = max(128, min(max_tile, (vmem_budget_bytes // per_col_bytes) // 128 * 128))
    n_steps = max(1, -(-hw128 // t_cap))
    if hw128 > 128:
        n_steps = max(n_steps, 2)
    tile = -(-hw128 // (n_steps * 128)) * 128
    return tile, n_steps * tile


def hard_scores(pred_bc_hw, mask_b_hw):
    """pred: (B, C, HW) f32, mask: (B, HW) f32 -> scores (B, HW_pad) f32."""
    B, C, HW = pred_bc_hw.shape
    T, HW_pad = _plan_hw_tiling(B, C, HW)
    if HW_pad != HW:
        # pad pred with 0 (p*log(p+1e-6) -> 0, no NaN) and mask with 1 (= certain)
        pred_bc_hw = jnp.pad(pred_bc_hw, ((0, 0), (0, 0), (0, HW_pad - HW)))
        mask_b_hw = jnp.pad(mask_b_hw, ((0, 0), (0, HW_pad - HW)), constant_values=1.0)
    return pl.pallas_call(
        _score_kernel,
        out_shape=jax.ShapeDtypeStruct((B, HW_pad), jnp.float32),
        grid=(HW_pad // T,),
        in_specs=[pl.BlockSpec((B, C, T), lambda t: (0, 0, t)),
                  pl.BlockSpec((B, T), lambda t: (0, t))],
        out_specs=pl.BlockSpec((B, T), lambda t: (0, t)),
        compiler_params=pltpu.CompilerParams(dimension_semantics=("parallel",)),
    )(pred_bc_hw, mask_b_hw)


# ----------------------------------------------------------------------------
# Kernel 2: fused L2-normalize + cosine + contrastive loss (single grid step)
#   c_flat : (D, L)       selected "current" projections, lane axis = B*K (padded)
#   p_flat : (P, D, L)    selected positive projections
#   n_valid (scalar prefetch, SMEM): (B,) int32 real hard-sample count per batch
# ----------------------------------------------------------------------------
def _contrast_kernel(inv_tau, K, B, nvalid_ref, c_ref, p_ref, o_ref):
    c = c_ref[...].astype(jnp.float32)                      # (D, L)
    p = p_ref[...].astype(jnp.float32)                      # (P, D, L)
    L = c.shape[-1]

    # L2 normalize along D (F.normalize eps); rsqrt goes to the EUP slot.
    c_hat = c * jax.lax.rsqrt(jnp.maximum(jnp.sum(c * c, axis=0, keepdims=True), 1e-24))
    p_hat = p * jax.lax.rsqrt(jnp.maximum(jnp.sum(p * p, axis=1, keepdims=True), 1e-24))

    # Positive term: sum over positive projections of cos(c_k, p_{p,k}) -> (1, L)
    pos = jnp.sum(c_hat[None, :, :] * p_hat, axis=(0, 1)).reshape(1, L)
    # TODO(synk): like the torch reference, exp(pos/tau) has no max-shift and can
    # overflow fp32 if the number of positive projections grows large.
    pos_e = jnp.exp(pos * inv_tau)

    # Lane-dense (L, L) Gram of the selected columns on the MXU.
    mat = jax.lax.dot_general(c_hat, c_hat, (((0,), (0,)), ((), ())),
                              preferred_element_type=jnp.float32)
    mat_e = jnp.exp(mat * inv_tau)

    # Validity / block-diagonal batch masks from the per-batch hard counts (SMEM).
    col = jax.lax.broadcasted_iota(jnp.int32, (1, L), 1)
    row = jax.lax.broadcasted_iota(jnp.int32, (L, 1), 0)
    nv_col = jnp.zeros((1, L), jnp.int32)
    nv_row = jnp.zeros((L, 1), jnp.int32)
    for b in range(B):                                      # B is small & static
        nv_b = nvalid_ref[b]
        nv_col = jnp.where(col // K == b, nv_b, nv_col)
        nv_row = jnp.where(row // K == b, nv_b, nv_row)
    col_valid = (col % K) < nv_col                          # (1, L)
    row_valid = (row % K) < nv_row                          # (L, 1)

    # neg[j] = sum over valid same-batch rows i != j of exp(cos(i,j)/tau)
    ii = jax.lax.broadcasted_iota(jnp.int32, (L, L), 0)
    jj = jax.lax.broadcasted_iota(jnp.int32, (L, L), 1)
    keep = (ii // K == jj // K) & (ii != jj) & row_valid
    neg = jnp.sum(jnp.where(keep, mat_e, 0.0), axis=0).reshape(1, L)

    # -log(pos_e / (pos_e + neg + 1e-8)) == log(pos_e + neg + 1e-8) - pos/tau
    loss_col = jnp.log(pos_e + neg + 1e-8) - pos * inv_tau

    # per-batch mean over valid samples, then mean over batch.
    # TODO(synk): a batch element with zero hard pixels contributes 0 here; the torch
    # reference would produce NaN (mean over an empty selection).
    w = col_valid.astype(jnp.float32) / (jnp.maximum(nv_col, 1).astype(jnp.float32) * B)
    o_ref[...] = jnp.sum(loss_col * w).reshape(1, 1)


def contrast_loss(c_flat, p_flat, n_valid, tau, K, B):
    D, L = c_flat.shape
    P = p_flat.shape[0]
    grid_spec = pltpu.PrefetchScalarGridSpec(
        num_scalar_prefetch=1,
        grid=(1,),
        in_specs=[pl.BlockSpec((D, L), lambda i, nv: (0, 0)),
                  pl.BlockSpec((P, D, L), lambda i, nv: (0, 0, 0))],
        out_specs=pl.BlockSpec((1, 1), lambda i, nv: (0, 0)),
    )
    out = pl.pallas_call(
        functools.partial(_contrast_kernel, float(1.0 / tau), K, B),
        out_shape=jax.ShapeDtypeStruct((1, 1), jnp.float32),
        grid_spec=grid_spec,
        compiler_params=pltpu.CompilerParams(dimension_semantics=("arbitrary",)),
    )(n_valid, c_flat, p_flat)
    return out[0, 0]


# ----------------------------------------------------------------------------
# Forward wrapper (glue: reshape, top-k selection, K-column gather, lane flatten)
# ----------------------------------------------------------------------------
def contrast4_forward(pred, proj_list, idx, pseudo_label, mask,
                      sample_num=5, tau=0.07):
    del pseudo_label                     # unused in the PyTorch forward as well
    B, C, H, W = pred.shape
    HW = H * W
    D = proj_list[0].shape[1]

    # 1) fused uncertainty + hard-pixel masking (Pallas), lane-dense over HW
    scores = hard_scores(pred.reshape(B, C, HW).astype(jnp.float32),
                         mask.reshape(B, HW).astype(jnp.float32))       # (B, HW_pad)

    # 2) hard-sample selection: top-k of sum_c p*log(p+1e-6) among hard pixels.
    #    TODO(synk): top-k itself has no clean Pallas equivalent; kept in plain JAX.
    K = min(max(8, ((sample_num + 7) // 8) * 8), HW)        # pad K to full sublanes
    vals, sel = jax.lax.top_k(scores, K)                    # (B, K), sorted desc
    # count of non-sentinel top-k values == min(num_hard, K); min with sample_num
    n_valid = jnp.minimum(jnp.sum((vals > -1e30).astype(jnp.int32), axis=1),
                          jnp.int32(sample_num))
    sel = jnp.minimum(sel, HW - 1)                          # clamp padded-column picks

    # 3) gather ONLY the K selected columns from the channel-major (B, D, HW)
    #    projections, flatten batch into the lane axis -> (D, B*K), zero-pad to L.
    sel_b1k = sel[:, None, :]                               # (B, 1, K)
    g_flat = []
    for prj in proj_list:
        g = jnp.take_along_axis(prj.reshape(B, D, HW), sel_b1k, axis=2)  # (B, D, K)
        g_flat.append(jnp.transpose(g, (1, 0, 2)).reshape(D, B * K))     # (D, B*K)
    c_flat = g_flat[idx]
    p_flat = jnp.stack([g for i, g in enumerate(g_flat) if i != idx], axis=0)

    L = max(128, ((B * K + 127) // 128) * 128)              # lane-dense padding
    if L != B * K:
        padc = L - B * K
        c_flat = jnp.pad(c_flat, ((0, 0), (0, padc)))
        p_flat = jnp.pad(p_flat, ((0, 0), (0, 0), (0, padc)))

    # 4) fused normalize + cosine + contrastive loss (Pallas, one grid step)
    return contrast_loss(c_flat, p_flat, n_valid, float(tau), K, B)


if __name__ == "__main__":
    key = jax.random.PRNGKey(0)
    B, C, H, W, D = 2, 4, 16, 16, 32
    k1, k2, k3, k4, k5 = jax.random.split(key, 5)

    # pred as class probabilities (NCHW)
    pred = jax.nn.softmax(jax.random.normal(k1, (B, C, H, W), dtype=jnp.float32), axis=1)
    # three projection maps (NCHW with D feature channels)
    proj_list = [jax.random.normal(k, (B, D, H, W), dtype=jnp.float32)
                 for k in (k2, k3, k4)]
    pseudo_label = jnp.zeros((B, H, W), dtype=jnp.int32)    # unused by forward
    # binary certainty mask; ~half the pixels are "uncertain" (mask == 0)
    mask = (jax.random.uniform(k5, (B, H, W)) > 0.5).astype(jnp.float32)

    loss = contrast4_forward(pred, proj_list, 0, pseudo_label, mask,
                             sample_num=5, tau=0.07)
    loss = jax.block_until_ready(loss)
    assert jnp.isfinite(loss)
    print("KERNEL_OK")
</pallas_src>

<mosaic_0001>
module attributes {stable_mosaic.version = 11 : i64} {
  func.func @_score_kernel(%arg0: i32, %arg1: memref<2x4x128xf32, #tpu.memory_space<vmem>>, %arg2: memref<2x128xf32, #tpu.memory_space<vmem>>, %arg3: memref<2x128xf32, #tpu.memory_space<vmem>>) attributes {dimension_semantics = [#tpu.dimension_semantics<parallel>], iteration_bounds = array<i64: 2>, scalar_prefetch = 0 : i64, scratch_operands = 0 : i64, tpu.core_type = #tpu.core_type<tc>, window_params = [{transform_indices = @transform_0, window_bounds = array<i64: 2, 4, 128>}, {transform_indices = @transform_1, window_bounds = array<i64: 2, 128>}, {transform_indices = @transform_2, window_bounds = array<i64: 2, 128>}]} {
    %c0 = arith.constant 0 : index
    %c0_0 = arith.constant 0 : index
    %c0_1 = arith.constant 0 : index
    %0 = vector.load %arg1[%c0, %c0_0, %c0_1] : memref<2x4x128xf32, #tpu.memory_space<vmem>>, vector<2x4x128xf32>
    %cst = arith.constant 9.99999997E-7 : f32
    %1 = vector.broadcast %cst : f32 to vector<2x4x128xf32>
    %2 = arith.addf %0, %1 : vector<2x4x128xf32>
    %3 = math.log %2 : vector<2x4x128xf32>
    %4 = arith.mulf %0, %3 : vector<2x4x128xf32>
    %cst_2 = arith.constant dense<0.000000e+00> : vector<2x128xf32>
    %5 = vector.multi_reduction <add>, %4, %cst_2 [1] : vector<2x4x128xf32> to vector<2x128xf32>
    %c0_3 = arith.constant 0 : index
    %c0_4 = arith.constant 0 : index
    %6 = vector.load %arg2[%c0_3, %c0_4] : memref<2x128xf32, #tpu.memory_space<vmem>>, vector<2x128xf32>
    %cst_5 = arith.constant 1.000000e+00 : f32
    %7 = vector.broadcast %cst_5 : f32 to vector<2x128xf32>
    %8 = arith.subf %7, %6 : vector<2x128xf32>
    %cst_6 = arith.constant 0.000000e+00 : f32
    %9 = vector.broadcast %cst_6 : f32 to vector<2x128xf32>
    %10 = arith.cmpf one, %8, %9 : vector<2x128xf32>
    %cst_7 = arith.constant -3.40282347E+38 : f32
    %11 = vector.broadcast %cst_7 : f32 to vector<2x128xf32>
    %12 = arith.select %10, %5, %11 : vector<2x128xi1>, vector<2x128xf32>
    %c0_8 = arith.constant 0 : index
    %c0_9 = arith.constant 0 : index
    %13 = vector.load %arg3[%c0_8, %c0_9] : memref<2x128xf32, #tpu.memory_space<vmem>>, vector<2x128xf32>
    tpu.vector_store %arg3[%c0_8, %c0_9], %12 {strides = array<i32>} : memref<2x128xf32, #tpu.memory_space<vmem>>, vector<2x128xf32>,
    return
  }
  func.func @transform_0(%arg0: i32) -> (i32, i32, i32) {
    %c0_i32 = arith.constant 0 : i32
    %c0_i32_0 = arith.constant 0 : i32
    %c0_i32_1 = arith.constant 0 : i32
    return %c0_i32, %c0_i32_0, %arg0 : i32, i32, i32
  }
  func.func @transform_1(%arg0: i32) -> (i32, i32) {
    %c0_i32 = arith.constant 0 : i32
    %c0_i32_0 = arith.constant 0 : i32
    return %c0_i32, %arg0 : i32, i32
  }
  func.func @transform_2(%arg0: i32) -> (i32, i32) {
    %c0_i32 = arith.constant 0 : i32
    %c0_i32_0 = arith.constant 0 : i32
    return %c0_i32, %arg0 : i32, i32
  }
}

</mosaic_0001>

<llo_original>
// kernel: tpu_custom_call.1
$region0: #{tpu_custom_call.1}
  #allocation0 [shape = 'u32[]', space=smem, size = 0x4, offset = 0x4, fixed_abs, tag = 'smem constant byte address 0x4 - core index']
  #allocation1 [shape = 'u32[144,128]{1,0:T(1,128)}', space=vmem, size = 0x12000, scoped, tag = 'internal scratch']
  %s0 = inlined_call_operand.hbm [shape: f32[2,4,256], index: 0, kind: input, shape index: {}]
  %s1 = inlined_call_operand.hbm [shape: f32[2,256], index: 1, kind: input, shape index: {}]
  %s2 = inlined_call_operand.hbm [shape: f32[2,256], index: 2, kind: output, shape index: {}]
  %s3 = sld [smem:[#allocation0]]
  $region49: #{tpu_custom_call.1} parent=0
    _
  %s5 = ssub.s32 1, %s3
  %s6 = scalar_select 0, %s5, %s3
  $region1: #{tpu_custom_call.1} parent=0
    #allocation2 [shape = 'u8[8192]{0}', space=vmem, size = 0x2000, scoped, tag = 'input window, operand 0']
    #allocation3 [shape = 's32[2]{0}', space=sflag, size = 0x8, scoped, tag = 'scoped memory for tpu_custom_call.1']
    #allocation4 [shape = 's32[2]{0}', space=sflag, size = 0x8, scoped, tag = 'scoped memory for tpu_custom_call.1']
    #allocation5 [shape = 'u8[2048]{0}', space=vmem, size = 0x800, scoped, tag = 'input window, operand 1']
    #allocation6 [shape = 's32[2]{0}', space=sflag, size = 0x8, scoped, tag = 'scoped memory for tpu_custom_call.1']
    #allocation7 [shape = 'u8[2048]{0}', space=vmem, size = 0x800, scoped, tag = 'output window, operand 0']
    %7 = vsyncpa [#allocation3], 0
    %s8 = scalar_lea.sflag [#allocation3], 1
    %9 = vsyncpa %s8, 0
    %10 = vsyncpa [#allocation6], 0
    %s11 = scalar_lea.sflag [#allocation6], 1
    %12 = vsyncpa %s11, 0
    %13 = vsyncpa [#allocation4], 0
    %s14 = scalar_lea.sflag [#allocation4], 1
    %15 = vsyncpa %s14, 0
    loop: start=0, step=1, limit=4
    $region2: #{tpu_custom_call.1} parent=1 // loop_pre_header
      _
    $region3: #{tpu_custom_call.1} parent=1 // loop_header
      %s17 = sphi 0, %s21
      %p18 = scmp.ge.s32.totalorder %s17, 4
      %s27 = sphi 0, %s29
      %s30 = sphi 0, %s27
      %s31 = sphi 0, %s30
      %s47 = sphi 0, %s31
      %s53 = sphi 0, %s55
      %s56 = sphi 0, %s53
      %s57 = sphi 0, %s56
      %s73 = sphi 0, %s57
      %s79 = sphi 0, %s81
      %s82 = sphi 0, %s79
      %s83 = sphi 0, %s82
      %s99 = sphi 0, %s83
    $region4: #{tpu_custom_call.1} parent=1 // loop_header_branch
      %20 = sbr.rel (%p18) target = $region8
    $region5: #{tpu_custom_call.1} parent=1 // loop_body
      %s22 = ssub.s32 %s17, 1
      %s23 = ssub.s32 %s17, 2
      %s24 = sadd.s32 %s17, 1
      %s25 = ssub.s32 %s17, %s24
      %p26 = scmp.eq.s32.totalorder %s25, 0
      %s28 = sadd.s32 %s27, 1
      %s29 = scalar_select %p26, %s27, %s28
      %p32 = pneg %p26
      %p33 = scmp.eq.s32.totalorder %s17, 1
      %p34 = por %p32, %p33
      %p35 = scmp.ne.s32.totalorder %s27, %s30
      %p36 = scmp.eq.s32.totalorder %s17, 0
      %p37 = por %p35, %p36
      %p38 = scmp.ne.s32.totalorder %s27, %s30
      %p39 = scmp.eq.s32.totalorder %s22, 1
      %p40 = por %p38, %p39
      %p41 = scmp.ne.s32.totalorder %s30, %s31
      %p42 = scmp.eq.s32.totalorder %s22, 0
      %p43 = por %p41, %p42
      %p44 = scmp.ne.s32.totalorder %s30, %s31
      %p45 = scmp.eq.s32.totalorder %s23, 1
      %p46 = por %p44, %p45
      %p48 = scmp.ne.s32.totalorder %s31, %s47
      %p49 = scmp.eq.s32.totalorder %s23, 0
      %p50 = por %p48, %p49
      %s51 = ssub.s32 %s17, %s24
      %p52 = scmp.eq.s32.totalorder %s51, 0
      %s54 = sadd.s32 %s53, 1
      %s55 = scalar_select %p52, %s53, %s54
      %p58 = pneg %p52
      %p59 = scmp.eq.s32.totalorder %s17, 1
      %p60 = por %p58, %p59
      %p61 = scmp.ne.s32.totalorder %s53, %s56
      %p62 = scmp.eq.s32.totalorder %s17, 0
      %p63 = por %p61, %p62
      %p64 = scmp.ne.s32.totalorder %s53, %s56
      %p65 = scmp.eq.s32.totalorder %s22, 1
      %p66 = por %p64, %p65
      %p67 = scmp.ne.s32.totalorder %s56, %s57
      %p68 = scmp.eq.s32.totalorder %s22, 0
      %p69 = por %p67, %p68
      %p70 = scmp.ne.s32.totalorder %s56, %s57
      %p71 = scmp.eq.s32.totalorder %s23, 1
      %p72 = por %p70, %p71
      %p74 = scmp.ne.s32.totalorder %s57, %s73
      %p75 = scmp.eq.s32.totalorder %s23, 0
      %p76 = por %p74, %p75
      %s77 = ssub.s32 %s17, %s24
      %p78 = scmp.eq.s32.totalorder %s77, 0
      %s80 = sadd.s32 %s79, 1
      %s81 = scalar_select %p78, %s79, %s80
      %p84 = pneg %p78
      %p85 = scmp.eq.s32.totalorder %s17, 1
      %p86 = por %p84, %p85
      %p87 = scmp.ne.s32.totalorder %s79, %s82
      %p88 = scmp.eq.s32.totalorder %s17, 0
      %p89 = por %p87, %p88
      %p90 = scmp.ne.s32.totalorder %s79, %s82
      %p91 = scmp.eq.s32.totalorder %s22, 1
      %p92 = por %p90, %p91
      %p93 = scmp.ne.s32.totalorder %s82, %s83
      %p94 = scmp.eq.s32.totalorder %s22, 0
      %p95 = por %p93, %p94
      %p96 = scmp.ne.s32.totalorder %s82, %s83
      %p97 = scmp.eq.s32.totalorder %s23, 1
      %p98 = por %p96, %p97
      %p100 = scmp.ne.s32.totalorder %s83, %s99
      %p101 = scmp.eq.s32.totalorder %s23, 0
      %p102 = por %p100, %p101
      %p103 = scmp.le.s32.totalorder 1, %s17
      %p104 = scmp.lt.s32.totalorder %s17, 3
      %p105 = pnand %p103, %p104
      %p106 = pneg %p105
      // Predicated region
      $region9: #{tpu_custom_call.1} parent=5 // pred_check
        _
      $region10: #{tpu_custom_call.1} parent=5 // pred_check_branch
        %108 = sbr.rel (%p105) target = $region12
      $region11: #{tpu_custom_call.1} parent=5 // pred_region
        %s109 = ssub.s32 %s17, 1
      $region12: #{tpu_custom_call.1} parent=5 // pred_fallthru
        _
      %p110 = scmp.lt.s32.totalorder %s17, 2
      // Predicated region
      $region13: #{tpu_custom_call.1} parent=5 // pred_check
        %p111 = pneg %p110
      $region14: #{tpu_custom_call.1} parent=5 // pred_check_branch
        %113 = sbr.rel (%p111) target = $region16
      $region15: #{tpu_custom_call.1} parent=5 // pred_region
        // Predicated region
        $region17: #{tpu_custom_call.1} parent=15 // pred_check
          %p114 = pneg %p37
        $region18: #{tpu_custom_call.1} parent=15 // pred_check_branch
          %116 = sbr.rel (%p114) target = $region20
        $region19: #{tpu_custom_call.1} parent=15 // pred_region
          %s117 = sand.u32 %s27, 1
          %s118 = scalar_lea.sflag [#allocation3], %s117
          %s119 = sand.u32 %s27, 1
          %s120 = smul.addr %s119, 8
          %s121 = scalar_lea.vmem [#allocation2], %s120
          %s123 = ssub.s32 128, 128
          %124 = vsyncadd %s118, %s123
          %s125 = smul.addr %s17, 64
          %s126 = scalar_lea.hbm %s0, %s125
          %s127 = sshll.u32 %s121, 4
          %s128 = int_to_ptr.vmem [resolvable:$true] %s127
          %133 = dma.hbm_to_vmem [thread:$0]  %s126, 128, %s128, %s118, 128, 64, 4
        $region20: #{tpu_custom_call.1} parent=15 // pred_fallthru
          _
        // Predicated region
        $region21: #{tpu_custom_call.1} parent=15 // pred_check
          %p134 = pneg %p63
        $region22: #{tpu_custom_call.1} parent=15 // pred_check_branch
          %136 = sbr.rel (%p134) target = $region24
        $region23: #{tpu_custom_call.1} parent=15 // pred_region
          %s137 = sand.u32 %s53, 1
          %s138 = scalar_lea.sflag [#allocation6], %s137
          %s139 = sand.u32 %s53, 1
          %s140 = smul.addr %s139, 2
          %s141 = scalar_lea.vmem [#allocation5], %s140
          %s143 = ssub.s32 32, 32
          %144 = vsyncadd %s138, %s143
          %s145 = smul.addr %s17, 32
          %s146 = scalar_lea.hbm %s1, %s145
          %s148 = sshll.u32 %s141, 4
          %s149 = int_to_ptr.vmem [resolvable:$true] %s148
          %151 = dma.hbm_to_vmem [thread:$0]  %s146, 32, %s149, %s138
        $region24: #{tpu_custom_call.1} parent=15 // pred_fallthru
          _
      $region16: #{tpu_custom_call.1} parent=5 // pred_fallthru
        _
      %p152 = scmp.le.s32.totalorder 1, %s17
      %p153 = scmp.lt.s32.totalorder %s17, 3
      %p154 = pnand %p152, %p153
      %p155 = pneg %p154
      // Predicated region
      $region25: #{tpu_custom_call.1} parent=5 // pred_check
        _
      $region26: #{tpu_custom_call.1} parent=5 // pred_check_branch
        %157 = sbr.rel (%p154) target = $region28
      $region27: #{tpu_custom_call.1} parent=5 // pred_region
        %s158 = ssub.s32 %s17, 1
        %s159 = sand.u32 %s30, 1
        %s160 = scalar_lea.sflag [#allocation3], %s159
        %s161 = sand.u32 %s30, 1
        %s162 = smul.addr %s161, 8
        %s163 = scalar_lea.vmem [#allocation2], %s162
        // Predicated region
        $region29: #{tpu_custom_call.1} parent=27 // pred_check
          %p164 = pneg %p43
        $region30: #{tpu_custom_call.1} parent=27 // pred_check_branch
          %166 = sbr.rel (%p164) target = $region32
        $region31: #{tpu_custom_call.1} parent=27 // pred_region
          %167 = dma.done %s160, 128
        $region32: #{tpu_custom_call.1} parent=27 // pred_fallthru
          _
        %s168 = sand.u32 %s56, 1
        %s169 = scalar_lea.sflag [#allocation6], %s168
        %s170 = sand.u32 %s56, 1
        %s171 = smul.addr %s170, 2
        %s172 = scalar_lea.vmem [#allocation5], %s171
        // Predicated region
        $region33: #{tpu_custom_call.1} parent=27 // pred_check
          %p173 = pneg %p69
        $region34: #{tpu_custom_call.1} parent=27 // pred_check_branch
          %175 = sbr.rel (%p173) target = $region36
        $region35: #{tpu_custom_call.1} parent=27 // pred_region
          %176 = dma.done %s169, 32
        $region36: #{tpu_custom_call.1} parent=27 // pred_fallthru
          _
        %s177 = sand.u32 %s30, 1
        %s178 = scalar_lea.sflag [#allocation3], %s177
        %s179 = sand.u32 %s30, 1
        %s180 = smul.addr %s179, 8
        %s181 = scalar_lea.vmem [#allocation2], %s180
        %p182 = pneg %p43
        %p183 = pneg %p40
        %s184 = sand.u32 %s56, 1
        %s185 = scalar_lea.sflag [#allocation6], %s184
        %s186 = sand.u32 %s56, 1
        %s187 = smul.addr %s186, 2
        %s188 = scalar_lea.vmem [#allocation5], %s187
        %p189 = pneg %p69
        %p190 = pneg %p66
        %p191 = pneg %p95
        %p192 = pneg %p92
        %s193 = sand.u32 %s82, 1
        %s194 = scalar_lea.sflag [#allocation4], %s193
        %s195 = sand.u32 %s82, 1
        %s196 = smul.addr %s195, 2
        %s197 = scalar_lea.vmem [#allocation7], %s196
        %v198 = vld [vmem:[%s163] sm:$0xf]
        %v199 = vld [vmem:[%s163 + $0x4] sm:$0xf]
        %v200 = vadd.f32 %v198, 1e-06
        %v201 = vadd.f32 %v199, 1e-06
        %v202 = vlog2.pop %v200
        %v203 = vmul.f32 %v202, 0.6931472
        %v204 = vlog2.pop %v201
        %v205 = vmul.f32 %v204, 0.6931472
        %v206 = vmul.f32 %v198, %v203
        %v207 = vmul.f32 %v199, %v205
        %vm208 = vcmask 1043456
        %v209 = vsel %vm208, %v206, 0.0
        %v210 = vrot.slane %v209, 4
        %v211 = vadd.f32 %v209, %v210
        %v212 = vrot.slane %v211, 2
        %v213 = vadd.f32 %v211, %v212
        %v214 = vrot.slane %v213, 1
        %v215 = vadd.f32 %v213, %v214
        %v216 = vsel %vm208, %v207, 0.0
        %v217 = vrot.slane %v216, 4
        %v218 = vadd.f32 %v216, %v217
        %v219 = vrot.slane %v218, 2
        %v220 = vadd.f32 %v218, %v219
        %v221 = vrot.slane %v220, 1
        %v222 = vadd.f32 %v220, %v221
        %v223 = vld [vmem:[%s172] sm:$0x3]
        %v224 = vsub.f32 1.0, %v223
        %vm225 = vcmp.ne.f32.partialorder %v224, 0.0
        %vm228 = vcmask 1041409
        %v229 = vsel %vm228, %v222, %v215
        %v231 = vsel %vm225, %v229, -3.4028235e+38
        %232 = vst [vmem:[%s197] sm:$0x3] %v231
        %s233 = sand.u32 %s82, 1
        %s234 = scalar_lea.sflag [#allocation4], %s233
        %s235 = sand.u32 %s82, 1
        %s236 = smul.addr %s235, 2
        %s237 = scalar_lea.vmem [#allocation7], %s236
        // Predicated region
        $region37: #{tpu_custom_call.1} parent=27 // pred_check
          %p238 = pneg %p92
        $region38: #{tpu_custom_call.1} parent=27 // pred_check_branch
          %240 = sbr.rel (%p238) target = $region40
        $region39: #{tpu_custom_call.1} parent=27 // pred_region
          %s242 = ssub.s32 32, 32
          %243 = vsyncadd %s234, %s242
          %s244 = smul.addr %s22, 32
          %s245 = scalar_lea.hbm %s2, %s244
          %s247 = sshll.u32 %s237, 4
          %s248 = int_to_ptr.vmem [resolvable:$true] %s247
          %250 = dma.vmem_to_hbm [thread:$0]  %s248, 32, %s245, %s234
        $region40: #{tpu_custom_call.1} parent=27 // pred_fallthru
          _
      $region28: #{tpu_custom_call.1} parent=5 // pred_fallthru
        _
      %p251 = scmp.le.s32.totalorder 2, %s17
      // Predicated region
      $region41: #{tpu_custom_call.1} parent=5 // pred_check
        %p252 = pneg %p251
      $region42: #{tpu_custom_call.1} parent=5 // pred_check_branch
        %254 = sbr.rel (%p252) target = $region44
      $region43: #{tpu_custom_call.1} parent=5 // pred_region
        %s255 = ssub.s32 %s17, 2
        // Predicated region
        $region45: #{tpu_custom_call.1} parent=43 // pred_check
          %p256 = pneg %p98
        $region46: #{tpu_custom_call.1} parent=43 // pred_check_branch
          %258 = sbr.rel (%p256) target = $region48
        $region47: #{tpu_custom_call.1} parent=43 // pred_region
          %s259 = sand.u32 %s83, 1
          %s260 = scalar_lea.sflag [#allocation4], %s259
          %s261 = sand.u32 %s83, 1
          %s262 = smul.addr %s261, 2
          %s263 = scalar_lea.vmem [#allocation7], %s262
          %264 = dma.done %s260, 32
        $region48: #{tpu_custom_call.1} parent=43 // pred_fallthru
          _
      $region44: #{tpu_custom_call.1} parent=5 // pred_fallthru
        _
    $region6: #{tpu_custom_call.1} parent=1 // loop_footer
      %s21 = sadd.s32 1, %s17
    $region7: #{tpu_custom_call.1} parent=1 // loop_footer_branch
      %16 = sbr.rel target = $region3
    $region8: #{tpu_custom_call.1} parent=1 // loop_exit
      _
    %265 = vsyncpa [#allocation3], 1
    %s266 = scalar_lea.sflag [#allocation3], 1
    %267 = vsyncpa %s266, 1
    %268 = vsyncpa [#allocation6], 1
    %s269 = scalar_lea.sflag [#allocation6], 1
    %270 = vsyncpa %s269, 1
    %271 = vsyncpa [#allocation4], 1
    %s272 = scalar_lea.sflag [#allocation4], 1
    %273 = vsyncpa %s272, 1

</llo_original>
